<compile_context>
chip_gen: v6e
topology: v6e:2x2x1
jax: 0.10.0
libtpu: 0.0.40
codegen_flags: <defaults>
</compile_context>

<pallas_src>
import functools

import jax
import jax.numpy as jnp
from jax.experimental import pallas as pl
from jax.experimental.pallas import tpu as pltpu

LANE = 128


def _round_up(x, m):
    return ((x + m - 1) // m) * m


def dqn_kernel(x_ref, w1_ref, b1_ref, w2_ref, b2_ref, out_ref):
    # fc1 + bias + ReLU: MXU matmul with f32 accumulation; bias add / relu on VPU.
    h = jnp.dot(x_ref[...], w1_ref[...], preferred_element_type=jnp.float32)
    h = jnp.maximum(h + b1_ref[...], 0.0)
    # fc2 on the lane-padded (H, 128) weight slab (MXU-friendly shape), then store
    # only the real action columns -> narrow HBM writeback.
    a = jnp.dot(h.astype(w2_ref.dtype), w2_ref[...],
                preferred_element_type=jnp.float32) + b2_ref[...]
    n_real = out_ref.shape[1]
    out_ref[...] = a[:, :n_real].astype(out_ref.dtype)


def pack_params(w1, b1, w2, b2, compute_dtype=jnp.float32):
    """One-time packing (call when params are created/updated, NOT per step):
    cast weights to compute_dtype and lane-pad fc2 to 128 output lanes."""
    D, H = w1.shape
    A = w2.shape[1]
    A_pad = _round_up(A, LANE)
    w1_p = w1.astype(compute_dtype)                                   # [D, H]
    b1_p = jnp.asarray(b1, jnp.float32).reshape(1, H)                 # [1, H] (f32 add)
    w2_p = jnp.zeros((H, A_pad), compute_dtype).at[:, :A].set(
        w2.astype(compute_dtype))                                     # [H, A_pad]
    b2_p = jnp.zeros((1, A_pad), jnp.float32).at[:, :A].set(
        jnp.asarray(b2, jnp.float32).reshape(1, A))                   # [1, A_pad]
    return w1_p, b1_p, w2_p, b2_p


def _choose_tile(batch, sublane):
    """Batch tile: single tile for tiny batches, otherwise >=2 tiles (v7x megacore)
    capped at 1024 rows, chosen to minimize batch padding."""
    b_aligned = _round_up(batch, sublane)
    if b_aligned <= sublane:
        return b_aligned
    return min(_round_up(pl.cdiv(b_aligned, 2), sublane), 1024)


@functools.partial(jax.jit, static_argnames=("n_actions",))
def linear_deep_q_network(state, packed_params, *, n_actions):
    """Forward pass: relu(state @ w1 + b1) @ w2 + b2.  Returns [B, n_actions] f32."""
    w1, b1, w2, b2 = packed_params
    B, D = state.shape
    H = w1.shape[1]
    A = n_actions
    A_pad = w2.shape[1]
    compute_dtype = w1.dtype
    itemsize = jnp.dtype(compute_dtype).itemsize
    sublane = 16 if itemsize == 2 else 8

    x = state.astype(compute_dtype)
    TB = _choose_tile(B, sublane)
    B_pad = _round_up(B, TB)
    if B_pad != B:
        x = jnp.pad(x, ((0, B_pad - B), (0, 0)))
    grid = (B_pad // TB,)

    # Scoped VMEM actually needed: double-buffered x/out tiles + resident weights.
    x_tile = TB * _round_up(D, LANE) * itemsize
    out_tile = TB * LANE * 4
    weights = ((_round_up(D, 8) + 8) * _round_up(H, LANE) * itemsize
               + (_round_up(H, 8) + 8) * A_pad * 4)
    vmem_limit = int(min(max(2 * (x_tile + out_tile) + weights + (1 << 20),
                             2 << 20), 32 << 20))

    cost = pl.CostEstimate(
        flops=2 * B_pad * D * H + 2 * B_pad * H * A_pad,
        transcendentals=0,
        bytes_accessed=(B_pad * D * itemsize + D * H * itemsize + H * 4
                        + H * A_pad * itemsize + A_pad * 4 + B_pad * A * 4),
    )

    out = pl.pallas_call(
        dqn_kernel,
        out_shape=jax.ShapeDtypeStruct((B_pad, A), jnp.float32),
        grid=grid,
        in_specs=[
            pl.BlockSpec((TB, D), lambda i: (i, 0)),        # batch-tiled activations
            pl.BlockSpec((D, H), lambda i: (0, 0)),         # w1: VMEM-resident
            pl.BlockSpec((1, H), lambda i: (0, 0)),         # b1: VMEM-resident
            pl.BlockSpec((H, A_pad), lambda i: (0, 0)),     # w2 (lane-padded)
            pl.BlockSpec((1, A_pad), lambda i: (0, 0)),     # b2 (lane-padded)
        ],
        out_specs=pl.BlockSpec((TB, A), lambda i: (i, 0)),  # narrow real-action store
        compiler_params=pltpu.CompilerParams(
            dimension_semantics=("parallel",),
            vmem_limit_bytes=vmem_limit,
        ),
        cost_estimate=cost,
    )(x, w1, b1, w2, b2)

    # Only batch padding to remove; action lanes are already exact.
    return out[:B]
    # TODO(synk): if the only consumer is greedy action selection, fuse the per-row
    # argmax over the real lanes into the kernel and return int32 indices instead.


def init_params(key, input_dims, hidden, n_actions):
    """Deterministic init mimicking torch.nn.Linear default:
    U(-1/sqrt(fan_in), 1/sqrt(fan_in)) for weights and biases."""
    k1, k2, k3, k4 = jax.random.split(key, 4)
    bound1 = 1.0 / jnp.sqrt(jnp.float32(input_dims))
    bound2 = 1.0 / jnp.sqrt(jnp.float32(hidden))
    w1 = jax.random.uniform(k1, (input_dims, hidden), jnp.float32, -bound1, bound1)
    b1 = jax.random.uniform(k2, (1, hidden), jnp.float32, -bound1, bound1)
    w2 = jax.random.uniform(k3, (hidden, n_actions), jnp.float32, -bound2, bound2)
    b2 = jax.random.uniform(k4, (1, n_actions), jnp.float32, -bound2, bound2)
    return w1, b1, w2, b2


if __name__ == "__main__":
    # CartPole-like DQN shapes: fc1 hidden is fixed at 128 by the module.
    input_dims, hidden, n_actions = 4, 128, 2

    key = jax.random.PRNGKey(0)
    k_state, k_params, k_big = jax.random.split(key, 3)
    w1, b1, w2, b2 = init_params(k_params, input_dims, hidden, n_actions)

    # Pack ONCE (outside the jitted per-step forward).
    packed = pack_params(w1, b1, w2, b2, compute_dtype=jnp.float32)

    def ref_fwd(s):
        return jnp.maximum(s @ w1 + b1, 0.0) @ w2 + b2

    # Small action-selection batch (single tile).
    state_small = jax.random.normal(k_state, (8, input_dims), jnp.float32)
    q_small = linear_deep_q_network(state_small, packed, n_actions=n_actions)
    jax.block_until_ready(q_small)
    assert q_small.shape == (8, n_actions)
    assert jnp.allclose(q_small, ref_fwd(state_small), atol=1e-5, rtol=1e-5)

    # Replay-buffer-sized batch (multi-tile grid + batch padding path).
    state_big = jax.random.normal(k_big, (300, input_dims), jnp.float32)
    q_big = linear_deep_q_network(state_big, packed, n_actions=n_actions)
    jax.block_until_ready(q_big)
    assert q_big.shape == (300, n_actions)
    assert jnp.allclose(q_big, ref_fwd(state_big), atol=1e-5, rtol=1e-5)

    # TODO(synk): the module's Adam optimizer and MSELoss are training machinery,
    # not part of the forward pass, so they are not implemented as kernels.
    print("KERNEL_OK")
</pallas_src>

<mosaic_0001>
module attributes {stable_mosaic.version = 11 : i64} {
  func.func @dqn_kernel(%arg0: i32, %arg1: memref<8x4xf32, #tpu.memory_space<vmem>>, %arg2: memref<4x128xf32, #tpu.memory_space<vmem>>, %arg3: memref<1x128xf32, #tpu.memory_space<vmem>>, %arg4: memref<128x128xf32, #tpu.memory_space<vmem>>, %arg5: memref<1x128xf32, #tpu.memory_space<vmem>>, %arg6: memref<8x2xf32, #tpu.memory_space<vmem>>) attributes {dimension_semantics = [#tpu.dimension_semantics<parallel>], iteration_bounds = array<i64: 1>, scalar_prefetch = 0 : i64, scratch_operands = 0 : i64, tpu.core_type = #tpu.core_type<tc>, window_params = [{transform_indices = @transform_0, window_bounds = array<i64: 8, 4>}, {pipeline_mode = #tpu.pipeline_mode<synchronous>, transform_indices = @transform_1, window_bounds = array<i64: 4, 128>}, {pipeline_mode = #tpu.pipeline_mode<synchronous>, transform_indices = @transform_2, window_bounds = array<i64: 1, 128>}, {pipeline_mode = #tpu.pipeline_mode<synchronous>, transform_indices = @transform_3, window_bounds = array<i64: 128, 128>}, {pipeline_mode = #tpu.pipeline_mode<synchronous>, transform_indices = @transform_4, window_bounds = array<i64: 1, 128>}, {transform_indices = @transform_5, window_bounds = array<i64: 8, 2>}]} {
    %c0 = arith.constant 0 : index
    %c0_0 = arith.constant 0 : index
    %0 = vector.load %arg1[%c0, %c0_0] : memref<8x4xf32, #tpu.memory_space<vmem>>, vector<8x4xf32>
    %c0_1 = arith.constant 0 : index
    %c0_2 = arith.constant 0 : index
    %1 = vector.load %arg2[%c0_1, %c0_2] : memref<4x128xf32, #tpu.memory_space<vmem>>, vector<4x128xf32>
    %cst = arith.constant dense<0.000000e+00> : vector<8x128xf32>
    %2 = tpu.matmul %0, %1, %cst {dimension_numbers = #tpu.dot_dimension_numbers<[1], [0], [0], [1], [0, 0, 1, 1], [], []>} : vector<8x4xf32>, vector<4x128xf32>, vector<8x128xf32> -> vector<8x128xf32>
    %c0_3 = arith.constant 0 : index
    %c0_4 = arith.constant 0 : index
    %3 = vector.load %arg3[%c0_3, %c0_4] : memref<1x128xf32, #tpu.memory_space<vmem>>, vector<1x128xf32>
    %4 = vector.broadcast %3 : vector<1x128xf32> to vector<8x128xf32>
    %5 = arith.addf %2, %4 : vector<8x128xf32>
    %cst_5 = arith.constant 0.000000e+00 : f32
    %6 = vector.broadcast %cst_5 : f32 to vector<8x128xf32>
    %7 = arith.maximumf %5, %6 : vector<8x128xf32>
    %c0_6 = arith.constant 0 : index
    %c0_7 = arith.constant 0 : index
    %8 = vector.load %arg4[%c0_6, %c0_7] : memref<128x128xf32, #tpu.memory_space<vmem>>, vector<128x128xf32>
    %cst_8 = arith.constant dense<0.000000e+00> : vector<8x128xf32>
    %9 = tpu.matmul %7, %8, %cst_8 {dimension_numbers = #tpu.dot_dimension_numbers<[1], [0], [0], [1], [0, 0, 1, 1], [], []>} : vector<8x128xf32>, vector<128x128xf32>, vector<8x128xf32> -> vector<8x128xf32>
    %c0_9 = arith.constant 0 : index
    %c0_10 = arith.constant 0 : index
    %10 = vector.load %arg5[%c0_9, %c0_10] : memref<1x128xf32, #tpu.memory_space<vmem>>, vector<1x128xf32>
    %11 = vector.broadcast %10 : vector<1x128xf32> to vector<8x128xf32>
    %12 = arith.addf %9, %11 : vector<8x128xf32>
    %13 = vector.extract_strided_slice %12 {offsets = [0, 0], sizes = [8, 2], strides = [1, 1]} : vector<8x128xf32> to vector<8x2xf32>
    %c0_11 = arith.constant 0 : index
    %c0_12 = arith.constant 0 : index
    %14 = vector.load %arg6[%c0_11, %c0_12] : memref<8x2xf32, #tpu.memory_space<vmem>>, vector<8x2xf32>
    tpu.vector_store %arg6[%c0_11, %c0_12], %13 {strides = array<i32>} : memref<8x2xf32, #tpu.memory_space<vmem>>, vector<8x2xf32>,
    return
  }
  func.func @transform_0(%arg0: i32) -> (i32, i32) {
    %c0_i32 = arith.constant 0 : i32
    %c0_i32_0 = arith.constant 0 : i32
    return %arg0, %c0_i32 : i32, i32
  }
  func.func @transform_1(%arg0: i32) -> (i32, i32) {
    %c0_i32 = arith.constant 0 : i32
    %c0_i32_0 = arith.constant 0 : i32
    %c0_i32_1 = arith.constant 0 : i32
    return %c0_i32, %c0_i32_0 : i32, i32
  }
  func.func @transform_2(%arg0: i32) -> (i32, i32) {
    %c0_i32 = arith.constant 0 : i32
    %c0_i32_0 = arith.constant 0 : i32
    %c0_i32_1 = arith.constant 0 : i32
    return %c0_i32, %c0_i32_0 : i32, i32
  }
  func.func @transform_3(%arg0: i32) -> (i32, i32) {
    %c0_i32 = arith.constant 0 : i32
    %c0_i32_0 = arith.constant 0 : i32
    %c0_i32_1 = arith.constant 0 : i32
    return %c0_i32, %c0_i32_0 : i32, i32
  }
  func.func @transform_4(%arg0: i32) -> (i32, i32) {
    %c0_i32 = arith.constant 0 : i32
    %c0_i32_0 = arith.constant 0 : i32
    %c0_i32_1 = arith.constant 0 : i32
    return %c0_i32, %c0_i32_0 : i32, i32
  }
  func.func @transform_5(%arg0: i32) -> (i32, i32) {
    %c0_i32 = arith.constant 0 : i32
    %c0_i32_0 = arith.constant 0 : i32
    return %arg0, %c0_i32 : i32, i32
  }
}

</mosaic_0001>

<llo_original>
// kernel: linear_deep_q_network.1
$region0: #{linear_deep_q_network.1}
  #allocation0 [shape = 'u32[]', space=smem, size = 0x4, offset = 0x4, fixed_abs, tag = 'smem constant byte address 0x4 - core index']
  #allocation1 [shape = 'u32[144,128]{1,0:T(1,128)}', space=vmem, size = 0x12000, scoped, tag = 'internal scratch']
  %s0 = inlined_call_operand.vmem [shape: f32[8,4], index: 0, kind: input, shape index: {}]
  %s1 = inlined_call_operand.vmem [shape: f32[4,128], index: 1, kind: input, shape index: {}]
  %s2 = inlined_call_operand.vmem [shape: f32[1,128], index: 2, kind: input, shape index: {}]
  %s3 = inlined_call_operand.hbm [shape: f32[128,128], index: 3, kind: input, shape index: {}]
  %s4 = inlined_call_operand.vmem [shape: f32[1,128], index: 4, kind: input, shape index: {}]
  %s5 = inlined_call_operand.vmem [shape: f32[8,2], index: 5, kind: output, shape index: {}]
  %s6 = sld [smem:[#allocation0]]
  $region34: #{linear_deep_q_network.1} parent=0
    _
  %s8 = ssub.s32 1, %s6
  %s9 = scalar_select 0, %s8, %s6
  $region1: #{linear_deep_q_network.1} parent=0
    #allocation2 [shape = 'u8[65536]{0}', space=vmem, size = 0x10000, scoped, tag = 'input window, operand 3, single buffered']
    #allocation3 [shape = 's32[1]{0}', space=sflag, size = 0x4, scoped, tag = 'scoped memory for linear_deep_q_network.1']
    %10 = vsyncpa [#allocation3], 0
    // Predicated region
    $region2: #{linear_deep_q_network.1} parent=1 // pred_check
      _
    $region3: #{linear_deep_q_network.1} parent=1 // pred_check_branch
      %12 = sbr.rel (0) target = $region5
    $region4: #{linear_deep_q_network.1} parent=1 // pred_region
      _
    $region5: #{linear_deep_q_network.1} parent=1 // pred_fallthru
      _
    // Predicated region
    $region6: #{linear_deep_q_network.1} parent=1 // pred_check
      _
    $region7: #{linear_deep_q_network.1} parent=1 // pred_check_branch
      %14 = sbr.rel (0) target = $region9
    $region8: #{linear_deep_q_network.1} parent=1 // pred_region
      _
    $region9: #{linear_deep_q_network.1} parent=1 // pred_fallthru
      _
    // Predicated region
    $region10: #{linear_deep_q_network.1} parent=1 // pred_check
      _
    $region11: #{linear_deep_q_network.1} parent=1 // pred_check_branch
      %16 = sbr.rel (0) target = $region13
    $region12: #{linear_deep_q_network.1} parent=1 // pred_region
      _
    $region13: #{linear_deep_q_network.1} parent=1 // pred_fallthru
      _
    // Predicated region
    $region14: #{linear_deep_q_network.1} parent=1 // pred_check
      _
    $region15: #{linear_deep_q_network.1} parent=1 // pred_check_branch
      %18 = sbr.rel (0) target = $region17
    $region16: #{linear_deep_q_network.1} parent=1 // pred_region
      %s20 = ssub.s32 2048, 2048
      %21 = vsyncadd [#allocation3], %s20
      %s22 = sshll.u32 [#allocation2], 4
      %s23 = int_to_ptr.vmem [resolvable:$true] %s22
      %28 = dma.hbm_to_vmem [thread:$0]  %s3, 2048, %s23, [#allocation3], 128, 128, 8
    $region17: #{linear_deep_q_network.1} parent=1 // pred_fallthru
      _
    // Predicated region
    $region18: #{linear_deep_q_network.1} parent=1 // pred_check
      _
    $region19: #{linear_deep_q_network.1} parent=1 // pred_check_branch
      %30 = sbr.rel (0) target = $region21
    $region20: #{linear_deep_q_network.1} parent=1 // pred_region
      _
    $region21: #{linear_deep_q_network.1} parent=1 // pred_fallthru
      _
    // Predicated region
    $region22: #{linear_deep_q_network.1} parent=1 // pred_check
      _
    $region23: #{linear_deep_q_network.1} parent=1 // pred_check_branch
      %32 = sbr.rel (0) target = $region25
    $region24: #{linear_deep_q_network.1} parent=1 // pred_region
      %33 = dma.done [#allocation3], 2048
    $region25: #{linear_deep_q_network.1} parent=1 // pred_fallthru
      _
    %v34 = vld [vmem:[%s0] sm:$0xff]
    %v35 = vld [vmem:[%s1] sm:$0xf]
    %v36 = vld [vmem:[%s2] sm:$0x1]
    %v38 = vlaneseq
    %v39 = vshrl.u32 %v38, 7
    %v40 = vsub.s32 0, %v39
    %v41 = vrot.slane %v36, %v40
    %vm43 = vcmask 31744
    %v45 = vsel %vm43, %v34, 0
    %vm47 = vcmask 1043456
    %v49 = vsel %vm47, %v35, 0
    %51 = vmatprep.subr.mxu0 0.0
    %52 = vmatpush1.msra.mxu0 0.0
    %53 = vmatprep.subr.mxu0 0.0
    %54 = vmatpush1.msra.mxu0 0.0
    %55 = vmatprep.subr.mxu0 0.0
    %56 = vmatpush1.msra.mxu0 0.0
    %57 = vmatprep.subr.mxu0 0.0
    %58 = vmatpush1.msra.mxu0 0.0
    %59 = vmatprep.subr.mxu0 0.0
    %60 = vmatpush1.msra.mxu0 0.0
    %61 = vmatprep.subr.mxu0 0.0
    %62 = vmatpush1.msra.mxu0 0.0
    %63 = vmatprep.subr.mxu0 0.0
    %64 = vmatpush1.msra.mxu0 0.0
    %65 = vmatprep.subr.mxu0 0.0
    %66 = vmatpush1.msra.mxu0 0.0
    %67 = vmatprep.subr.mxu0 0.0
    %68 = vmatpush1.msra.mxu0 0.0
    %69 = vmatprep.subr.mxu0 0.0
    %70 = vmatpush1.msra.mxu0 0.0
    %71 = vmatprep.subr.mxu0 0.0
    %72 = vmatpush1.msra.mxu0 0.0
    %73 = vmatprep.subr.mxu0 0.0
    %74 = vmatpush1.msra.mxu0 0.0
    %75 = vmatprep.subr.mxu0 0.0
    %76 = vmatpush1.msra.mxu0 0.0
    %77 = vmatprep.subr.mxu0 0.0
    %78 = vmatpush1.msra.mxu0 0.0
    %79 = vmatprep.subr.mxu0 0.0
    %80 = vmatpush1.msra.mxu0 0.0
    %81 = vmatprep.subr.mxu0 0.0
    %82 = vmatpush1.msra.mxu0 %v49
    %83 = vmatprep.subr.mxu0 0.0
    %84 = vmatpush2.msra.mxu0 0.0
    %85 = vmatprep.subr.mxu0 0.0
    %86 = vmatpush2.msra.mxu0 0.0
    %87 = vmatprep.subr.mxu0 0.0
    %88 = vmatpush2.msra.mxu0 0.0
    %89 = vmatprep.subr.mxu0 0.0
    %90 = vmatpush2.msra.mxu0 0.0
    %91 = vmatprep.subr.mxu0 0.0
    %92 = vmatpush2.msra.mxu0 0.0
    %93 = vmatprep.subr.mxu0 0.0
    %94 = vmatpush2.msra.mxu0 0.0
    %95 = vmatprep.subr.mxu0 0.0
    %96 = vmatpush2.msra.mxu0 0.0
    %97 = vmatprep.subr.mxu0 0.0
    %98 = vmatpush2.msra.mxu0 0.0
    %99 = vmatprep.subr.mxu0 0.0
    %100 = vmatpush2.msra.mxu0 0.0
    %101 = vmatprep.subr.mxu0 0.0
    %102 = vmatpush2.msra.mxu0 0.0
    %103 = vmatprep.subr.mxu0 0.0
    %104 = vmatpush2.msra.mxu0 0.0
    %105 = vmatprep.subr.mxu0 0.0
    %106 = vmatpush2.msra.mxu0 0.0
    %107 = vmatprep.subr.mxu0 0.0
    %108 = vmatpush2.msra.mxu0 0.0
    %109 = vmatprep.subr.mxu0 0.0
    %110 = vmatpush2.msra.mxu0 0.0
    %111 = vmatprep.subr.mxu0 0.0
    %112 = vmatpush2.msra.mxu0 0.0
    %113 = vmatprep.subr.mxu0 0.0
    %114 = vmatpush2.msra.mxu0 0.0
    %115 = vmatprep.mubr.f32.mxu0 0.0
    %116 = vmatmul.mubr.f32.gmra.mxu0 %v45
    %v117 = vpop.f32.mrf.mxu0
    %v118 = vadd.f32 %v41, %v117
    %v119 = vpop.f32.mrf.mxu0
    %120 = vdwg.mxu0
    %v121 = vmax.f32 %v118, 0.0
    %v122 = vld [vmem:[#allocation2] sm:$0xff]
    %v123 = vld [vmem:[#allocation2 + $0x8] sm:$0xff]
    %v124 = vld [vmem:[#allocation2 + $0x10] sm:$0xff]
    %v125 = vld [vmem:[#allocation2 + $0x18] sm:$0xff]
    %v126 = vld [vmem:[#allocation2 + $0x20] sm:$0xff]
    %v127 = vld [vmem:[#allocation2 + $0x28] sm:$0xff]
    %v128 = vld [vmem:[#allocation2 + $0x30] sm:$0xff]
    %v129 = vld [vmem:[#allocation2 + $0x38] sm:$0xff]
    %v130 = vld [vmem:[#allocation2 + $0x40] sm:$0xff]
    %v131 = vld [vmem:[#allocation2 + $0x48] sm:$0xff]
    %v132 = vld [vmem:[#allocation2 + $0x50] sm:$0xff]
    %v133 = vld [vmem:[#allocation2 + $0x58] sm:$0xff]
    %v134 = vld [vmem:[#allocation2 + $0x60] sm:$0xff]
    %v135 = vld [vmem:[#allocation2 + $0x68] sm:$0xff]
    %v136 = vld [vmem:[#allocation2 + $0x70] sm:$0xff]
    %v137 = vld [vmem:[#allocation2 + $0x78] sm:$0xff]
    %v138 = vld [vmem:[%s4] sm:$0x1]
    %v140 = vlaneseq
    %v141 = vshrl.u32 %v140, 7
    %v142 = vsub.s32 0, %v141
    %v143 = vrot.slane %v138, %v142
    %145 = vmatprep.subr.mxu0 0.0
    %146 = vmatpush1.msra.mxu0 %v137
    %147 = vmatprep.subr.mxu0 0.0
    %148 = vmatpush1.msra.mxu0 %v136
    %149 = vmatprep.subr.mxu0 0.0
    %150 = vmatpush1.msra.mxu0 %v135
    %151 = vmatprep.subr.mxu0 0.0
    %152 = vmatpush1.msra.mxu0 %v134
    %153 = vmatprep.subr.mxu0 0.0
    %154 = vmatpush1.msra.mxu0 %v133
    %155 = vmatprep.subr.mxu0 0.0
    %156 = vmatpush1.msra.mxu0 %v132
    %157 = vmatprep.subr.mxu0 0.0
    %158 = vmatpush1.msra.mxu0 %v131
    %159 = vmatprep.subr.mxu0 0.0
    %160 = vmatpush1.msra.mxu0 %v130
    %161 = vmatprep.subr.mxu0 0.0
    %162 = vmatpush1.msra.mxu0 %v129
    %163 = vmatprep.subr.mxu0 0.0
    %164 = vmatpush1.msra.mxu0 %v128
    %165 = vmatprep.subr.mxu0 0.0
    %166 = vmatpush1.msra.mxu0 %v127
    %167 = vmatprep.subr.mxu0 0.0
    %168 = vmatpush1.msra.mxu0 %v126
    %169 = vmatprep.subr.mxu0 0.0
    %170 = vmatpush1.msra.mxu0 %v125
    %171 = vmatprep.subr.mxu0 0.0
    %172 = vmatpush1.msra.mxu0 %v124
    %173 = vmatprep.subr.mxu0 0.0
    %174 = vmatpush1.msra.mxu0 %v123
    %175 = vmatprep.subr.mxu0 0.0
    %176 = vmatpush1.msra.mxu0 %v122
    %177 = vmatprep.subr.mxu0 0.0
    %178 = vmatpush2.msra.mxu0 0.0
    %179 = vmatprep.subr.mxu0 0.0
    %180 = vmatpush2.msra.mxu0 0.0
    %181 = vmatprep.subr.mxu0 0.0
    %182 = vmatpush2.msra.mxu0 0.0
    %183 = vmatprep.subr.mxu0 0.0
    %184 = vmatpush2.msra.mxu0 0.0
    %185 = vmatprep.subr.mxu0 0.0
    %186 = vmatpush2.msra.mxu0 0.0
    %187 = vmatprep.subr.mxu0 0.0
    %188 = vmatpush2.msra.mxu0 0.0
    %189 = vmatprep.subr.mxu0 0.0
    %190 = vmatpush2.msra.mxu0 0.0
    %191 = vmatprep.subr.mxu0 0.0
    %192 = vmatpush2.msra.mxu0 0.0
    %193 = vmatprep.subr.mxu0 0.0
    %194 = vmatpush2.msra.mxu0 0.0
    %195 = vmatprep.subr.mxu0 0.0
    %196 = vmatpush2.msra.mxu0 0.0
    %197 = vmatprep.subr.mxu0 0.0
    %198 = vmatpush2.msra.mxu0 0.0
    %199 = vmatprep.subr.mxu0 0.0
    %200 = vmatpush2.msra.mxu0 0.0
    %201 = vmatprep.subr.mxu0 0.0
    %202 = vmatpush2.msra.mxu0 0.0
    %203 = vmatprep.subr.mxu0 0.0
    %204 = vmatpush2.msra.mxu0 0.0
    %205 = vmatprep.subr.mxu0 0.0
    %206 = vmatpush2.msra.mxu0 0.0
    %207 = vmatprep.subr.mxu0 0.0
    %208 = vmatpush2.msra.mxu0 0.0
    %209 = vmatprep.mubr.f32.mxu0 0.0
    %210 = vmatmul.mubr.f32.gmra.mxu0 %v121
    %v211 = vpop.f32.mrf.mxu0
    %v212 = vadd.f32 %v143, %v211
    %v213 = vpop.f32.mrf.mxu0
    %214 = vdwg.mxu0
    %vm215 = vcmask 15360
    %216 = vst.msk [vmem:[%s5] sm:$0xff] %vm215, %v212
    // Predicated region
    $region26: #{linear_deep_q_network.1} parent=1 // pred_check
      _
    $region27: #{linear_deep_q_network.1} parent=1 // pred_check_branch
      %218 = sbr.rel (0) target = $region29
    $region28: #{linear_deep_q_network.1} parent=1 // pred_region
      _
    $region29: #{linear_deep_q_network.1} parent=1 // pred_fallthru
      _
    // Predicated region
    $region30: #{linear_deep_q_network.1} parent=1 // pred_check
      _
    $region31: #{linear_deep_q_network.1} parent=1 // pred_check_branch
      %220 = sbr.rel (0) target = $region33
    $region32: #{linear_deep_q_network.1} parent=1 // pred_region
      _
    $region33: #{linear_deep_q_network.1} parent=1 // pred_fallthru
      _
    %221 = vsyncpa [#allocation3], 1

</llo_original>
